<compile_context>
chip_gen: v6e
topology: v6e:2x2x1
jax: 0.10.0
libtpu: 0.0.40
codegen_flags: <defaults>
</compile_context>

<pallas_src>
import functools

import jax
import jax.numpy as jnp
from jax import lax
from jax.experimental import pallas as pl
from jax.experimental.pallas import tpu as pltpu

_LANE = 128
_DEFAULT_BLOCK_ELEMS = 512 * 1024     # ~2 MiB f32 per input per pipeline buffer
_DEFAULT_MAX_LANE_WIDTH = 1024        # preferred upper bound on W (lanes per flat row)
_MIN_PALLAS_ELEMS = 32 * 1024         # below this a fused XLA reduction wins
                                      # TODO(synk): benchmark the exact crossover.


def _pick_lane_width(n: int, c: int, max_w: int):
    """Pick lane width W = c*d with d | n and W >= 128 (None if impossible).

    W must divide N*C exactly (so the flat reshape is metadata-only) and be a
    multiple of C (so lane l always holds column l % C).  Prefer W that is a
    multiple of 128 (exact (8,128) tiling), then the largest such W.
    """
    hi = max(max_w, c)                 # always allow W == c when c >= 128
    best = None
    best_key = None
    d = 1
    while d * c <= hi and d <= n:
        if n % d == 0:
            w = c * d
            if w >= _LANE:
                key = (w % _LANE == 0, w)
                if best_key is None or key > best_key:
                    best, best_key = w, key
        d += 1
    return best


def _mcrmse_partial_kernel(pred_ref, tgt_ref, acc_ref, *,
                           rows, tile_rows, steps_per_chunk, need_mask):
    """Accumulate per-lane sums of squared diffs for one (TR, W) block.

    pred_ref, tgt_ref : (TR, W) VMEM blocks of the flat-reshaped inputs
    acc_ref           : (1, W) f32 output block, resident across the reduction
                        axis -> per-chunk (per-TensorCore) partial sums.
    """
    p = pl.program_id(0)        # parallel chunk (TensorCore on v7x)
    s = pl.program_id(1)        # reduction step within the chunk

    @pl.when(s == 0)
    def _init():
        acc_ref[...] = jnp.zeros_like(acc_ref)

    diff = tgt_ref[...].astype(jnp.float32) - pred_ref[...].astype(jnp.float32)
    sq = diff * diff

    if need_mask:
        # Rows at/after `rows` are either the ragged tail of the last block or a
        # clamped duplicate block from the parallel split: zero them out.
        blk = p * steps_per_chunk + s
        rows_left = rows - blk * tile_rows
        rid = lax.broadcasted_iota(jnp.int32, sq.shape, 0)
        sq = jnp.where(rid < rows_left, sq, 0.0)

    # Wide per-lane accumulator: vreg-wise VALU adds + one sublane reduce per
    # step.  The cross-lane fold onto the C real columns happens once, in the
    # wrapper, not in the hot loop.
    acc_ref[...] += jnp.sum(sq, axis=0, keepdims=True)


def mcrmse_loss(outputs: jax.Array, targets: jax.Array, *,
                block_elems: int = _DEFAULT_BLOCK_ELEMS,
                max_lane_width: int = _DEFAULT_MAX_LANE_WIDTH,
                min_pallas_elems: int = _MIN_PALLAS_ELEMS) -> jax.Array:
    """Mean column-wise RMSE, matching MCRMSELoss.forward(outputs, targets)."""
    assert outputs.shape == targets.shape, (outputs.shape, targets.shape)
    assert outputs.ndim == 2, "expected (batch, columns) inputs"
    n, c = outputs.shape
    total = n * c

    # Tiny problems: one fused XLA reduction beats the pallas_call fixed cost.
    if total < min_pallas_elems:
        return _mcrmse_reference(outputs, targets)

    w = _pick_lane_width(n, c, max_lane_width)
    if w is None:
        # TODO(synk): masked-tail kernel for batch sizes with no divisor giving a
        # >=128-lane flat width (e.g. prime N); until then use the fused XLA
        # reduction, which is still a single HBM pass.
        return _mcrmse_reference(outputs, targets)

    r = total // w                                  # exact by construction

    # Rows per grid step: ~block_elems elements per input per buffer, multiple
    # of 8 sublanes, capped at the full row count.
    tr_target = max(8, (block_elems // w) // 8 * 8)
    tr = r if r <= tr_target else tr_target

    n_blocks = pl.cdiv(r, tr)
    p_chunks = 2 if n_blocks >= 2 else 1            # v7x: one chunk per TensorCore
    steps = pl.cdiv(n_blocks, p_chunks)
    overshoot = p_chunks * steps > n_blocks
    need_mask = (r % tr != 0) or overshoot

    if overshoot:
        def in_map(p, s):
            # Clamp the (at most one) out-of-range block; it is fully masked in
            # the kernel so it contributes exactly zero.
            return (jnp.minimum(p * steps + s, n_blocks - 1), 0)
    else:
        def in_map(p, s):
            return (p * steps + s, 0)

    # Metadata-only reshapes of the contiguous (N, C) buffers: no extra HBM pass.
    pred2d = jnp.reshape(outputs, (r, w))
    tgt2d = jnp.reshape(targets, (r, w))

    kernel = functools.partial(
        _mcrmse_partial_kernel,
        rows=r, tile_rows=tr, steps_per_chunk=steps, need_mask=need_mask)

    bytes_in = total * (outputs.dtype.itemsize + targets.dtype.itemsize)
    cost = pl.CostEstimate(
        flops=4 * total,                             # sub, mul, mask/accumulate adds
        transcendentals=0,                           # sqrt happens in the wrapper
        bytes_accessed=bytes_in + p_chunks * w * 4)

    partial = pl.pallas_call(
        kernel,
        out_shape=jax.ShapeDtypeStruct((p_chunks, 1, w), jnp.float32),
        grid_spec=pltpu.PrefetchScalarGridSpec(
            num_scalar_prefetch=0,
            grid=(p_chunks, steps),
            in_specs=[
                pl.BlockSpec((tr, w), in_map),
                pl.BlockSpec((tr, w), in_map),
            ],
            out_specs=pl.BlockSpec((None, 1, w), lambda p, s: (p, 0, 0)),
        ),
        compiler_params=pltpu.CompilerParams(
            dimension_semantics=("parallel", "arbitrary")),
        cost_estimate=cost,
    )(pred2d, tgt2d)

    # Finalize (tiny, O(W) work): fold the W lane phases onto the C real columns
    # (lane l holds column l % C), scale by 1/N, sqrt per column, mean over C.
    lane_sums = jnp.sum(partial, axis=(0, 1))            # (W,)
    col_sums = jnp.sum(lane_sums.reshape(-1, c), axis=0)  # (C,)
    return jnp.mean(jnp.sqrt(col_sums / n))


def _mcrmse_reference(outputs, targets):
    o = outputs.astype(jnp.float32)
    t = targets.astype(jnp.float32)
    colwise_mse = jnp.mean(jnp.square(t - o), axis=0)
    return jnp.mean(jnp.sqrt(colwise_mse), axis=0)


if __name__ == "__main__":
    key = jax.random.PRNGKey(0)
    k_pred, k_tgt = jax.random.split(key)

    def check(n, c, dtype=jnp.float32, **kw):
        pred = jax.random.normal(k_pred, (n, c), dtype=jnp.float32).astype(dtype)
        tgt = jax.random.normal(k_tgt, (n, c), dtype=jnp.float32).astype(dtype)
        got = mcrmse_loss(pred, tgt, **kw)
        jax.block_until_ready(got)
        want = _mcrmse_reference(pred, tgt)
        assert jnp.allclose(got, want, atol=1e-5, rtol=1e-4), (n, c, got, want)

    # Single-block kernel path (W=768, R=8, one grid step).
    check(1024, 6, min_pallas_elems=0)
    # Multi-step accumulation + 2-way "parallel" split (W=768, R=32, TR=8, 2x2 grid).
    check(4096, 6, min_pallas_elems=0, block_elems=4096)
    # Ragged tail + clamped overshoot block (W=768, R=20, TR=8, 3 blocks on a 2x2 grid).
    check(2560, 6, min_pallas_elems=0, block_elems=4096)
    # bf16 inputs (kernel accumulates in f32).
    check(1024, 6, dtype=jnp.bfloat16, min_pallas_elems=0)
    # Tiny input -> fused jnp fallback (no kernel launch).
    check(8, 6)

    print("KERNEL_OK")
</pallas_src>

<mosaic_0001>
module attributes {stable_mosaic.version = 11 : i64} {
  func.func @_mcrmse_partial_kernel(%arg0: i32, %arg1: i32, %arg2: memref<8x768xf32, #tpu.memory_space<vmem>>, %arg3: memref<8x768xf32, #tpu.memory_space<vmem>>, %arg4: memref<1x1x768xf32, #tpu.memory_space<vmem>>) attributes {dimension_semantics = [#tpu.dimension_semantics<parallel>, #tpu.dimension_semantics<arbitrary>], iteration_bounds = array<i64: 1, 1>, scalar_prefetch = 0 : i64, scratch_operands = 0 : i64, tpu.core_type = #tpu.core_type<tc>, window_params = [{transform_indices = @transform_0, window_bounds = array<i64: 8, 768>}, {transform_indices = @transform_1, window_bounds = array<i64: 8, 768>}, {transform_indices = @transform_2, window_bounds = array<i64: 1, 1, 768>}]} {
    %c0_i32 = arith.constant 0 : i32
    %0 = arith.cmpi eq, %arg1, %c0_i32 : i32
    %1 = arith.extui %0 : i1 to i32
    %c0_i32_0 = arith.constant 0 : i32
    %2 = arith.cmpi ne, %1, %c0_i32_0 : i32
    scf.if %2 {
      %cst_10 = arith.constant 0.000000e+00 : f32
      %15 = vector.broadcast %cst_10 : f32 to vector<1x768xf32>
      %c0_11 = arith.constant 0 : index
      %c0_12 = arith.constant 0 : index
      %c0_13 = arith.constant 0 : index
      %16 = vector.load %arg4[%c0_11, %c0_12, %c0_13] : memref<1x1x768xf32, #tpu.memory_space<vmem>>, vector<1x1x768xf32>
      %17 = vector.shape_cast %16 : vector<1x1x768xf32> to vector<1x768xf32>
      %18 = vector.shape_cast %15 : vector<1x768xf32> to vector<1x1x768xf32>
      tpu.vector_store %arg4[%c0_11, %c0_12, %c0_13], %18 {strides = array<i32>} : memref<1x1x768xf32, #tpu.memory_space<vmem>>, vector<1x1x768xf32>,
    } else {
    }
    %c0 = arith.constant 0 : index
    %c0_1 = arith.constant 0 : index
    %3 = vector.load %arg3[%c0, %c0_1] : memref<8x768xf32, #tpu.memory_space<vmem>>, vector<8x768xf32>
    %c0_2 = arith.constant 0 : index
    %c0_3 = arith.constant 0 : index
    %4 = vector.load %arg2[%c0_2, %c0_3] : memref<8x768xf32, #tpu.memory_space<vmem>>, vector<8x768xf32>
    %5 = arith.subf %3, %4 : vector<8x768xf32>
    %6 = arith.mulf %5, %5 : vector<8x768xf32>
    %c0_4 = arith.constant 0 : index
    %c0_5 = arith.constant 0 : index
    %c0_6 = arith.constant 0 : index
    %7 = vector.load %arg4[%c0_4, %c0_5, %c0_6] : memref<1x1x768xf32, #tpu.memory_space<vmem>>, vector<1x1x768xf32>
    %8 = vector.shape_cast %7 : vector<1x1x768xf32> to vector<1x768xf32>
    %cst = arith.constant dense<0.000000e+00> : vector<768xf32>
    %9 = vector.multi_reduction <add>, %6, %cst [0] : vector<8x768xf32> to vector<768xf32>
    %10 = vector.shape_cast %9 : vector<768xf32> to vector<1x768xf32>
    %11 = arith.addf %8, %10 : vector<1x768xf32>
    %c0_7 = arith.constant 0 : index
    %c0_8 = arith.constant 0 : index
    %c0_9 = arith.constant 0 : index
    %12 = vector.load %arg4[%c0_7, %c0_8, %c0_9] : memref<1x1x768xf32, #tpu.memory_space<vmem>>, vector<1x1x768xf32>
    %13 = vector.shape_cast %12 : vector<1x1x768xf32> to vector<1x768xf32>
    %14 = vector.shape_cast %11 : vector<1x768xf32> to vector<1x1x768xf32>
    tpu.vector_store %arg4[%c0_7, %c0_8, %c0_9], %14 {strides = array<i32>} : memref<1x1x768xf32, #tpu.memory_space<vmem>>, vector<1x1x768xf32>,
    return
  }
  func.func @transform_0(%arg0: i32, %arg1: i32) -> (i32, i32) {
    %c1_i32 = arith.constant 1 : i32
    %0 = arith.muli %arg0, %c1_i32 : i32
    %1 = arith.addi %0, %arg1 : i32
    %c0_i32 = arith.constant 0 : i32
    %c0_i32_0 = arith.constant 0 : i32
    return %1, %c0_i32 : i32, i32
  }
  func.func @transform_1(%arg0: i32, %arg1: i32) -> (i32, i32) {
    %c1_i32 = arith.constant 1 : i32
    %0 = arith.muli %arg0, %c1_i32 : i32
    %1 = arith.addi %0, %arg1 : i32
    %c0_i32 = arith.constant 0 : i32
    %c0_i32_0 = arith.constant 0 : i32
    return %1, %c0_i32 : i32, i32
  }
  func.func @transform_2(%arg0: i32, %arg1: i32) -> (i32, i32, i32) {
    %c0_i32 = arith.constant 0 : i32
    %c0_i32_0 = arith.constant 0 : i32
    %c0_i32_1 = arith.constant 0 : i32
    return %arg0, %c0_i32, %c0_i32_0 : i32, i32, i32
  }
}

</mosaic_0001>

<llo_original>
// kernel: tpu_custom_call.1
$region0: #{tpu_custom_call.1}
  #allocation0 [shape = 'u32[]', space=smem, size = 0x4, offset = 0x4, fixed_abs, tag = 'smem constant byte address 0x4 - core index']
  #allocation1 [shape = 'u32[144,128]{1,0:T(1,128)}', space=vmem, size = 0x12000, scoped, tag = 'internal scratch']
  %s0 = inlined_call_operand.hbm [shape: f32[8,768], index: 0, kind: input, shape index: {}]
  %s1 = inlined_call_operand.hbm [shape: f32[8,768], index: 1, kind: input, shape index: {}]
  %s2 = inlined_call_operand.hbm [shape: f32[1,1,768], index: 2, kind: output, shape index: {}]
  %s3 = sld [smem:[#allocation0]]
  $region30: #{tpu_custom_call.1} parent=0
    _
  %s5 = ssub.s32 1, %s3
  %s6 = scalar_select 0, %s5, %s3
  $region1: #{tpu_custom_call.1} parent=0
    #allocation2 [shape = 'u8[24576]{0}', space=vmem, size = 0x6000, scoped, tag = 'input window, operand 0, single buffered']
    #allocation3 [shape = 's32[1]{0}', space=sflag, size = 0x4, scoped, tag = 'scoped memory for tpu_custom_call.1']
    #allocation4 [shape = 's32[1]{0}', space=sflag, size = 0x4, scoped, tag = 'scoped memory for tpu_custom_call.1']
    #allocation5 [shape = 'u8[24576]{0}', space=vmem, size = 0x6000, scoped, tag = 'input window, operand 1, single buffered']
    #allocation6 [shape = 's32[1]{0}', space=sflag, size = 0x4, scoped, tag = 'scoped memory for tpu_custom_call.1']
    #allocation7 [shape = 'u8[3072]{0}', space=vmem, size = 0xc00, scoped, tag = 'output window, operand 0, single buffered']
    %7 = vsyncpa [#allocation3], 0
    %8 = vsyncpa [#allocation6], 0
    %9 = vsyncpa [#allocation4], 0
    // Predicated region
    $region2: #{tpu_custom_call.1} parent=1 // pred_check
      _
    $region3: #{tpu_custom_call.1} parent=1 // pred_check_branch
      %11 = sbr.rel (0) target = $region5
    $region4: #{tpu_custom_call.1} parent=1 // pred_region
      %s12 = sadd.s32 0, 0
      %s14 = ssub.s32 768, 768
      %15 = vsyncadd [#allocation3], %s14
      %s16 = smul.addr %s12, 6
      %s17 = smul.addr %s16, 128
      %s18 = scalar_lea.hbm %s0, %s17
      %s20 = sshll.u32 [#allocation2], 4
      %s21 = int_to_ptr.vmem [resolvable:$true] %s20
      %23 = dma.hbm_to_vmem [thread:$0]  %s18, 768, %s21, [#allocation3]
    $region5: #{tpu_custom_call.1} parent=1 // pred_fallthru
      _
    // Predicated region
    $region6: #{tpu_custom_call.1} parent=1 // pred_check
      _
    $region7: #{tpu_custom_call.1} parent=1 // pred_check_branch
      %25 = sbr.rel (0) target = $region9
    $region8: #{tpu_custom_call.1} parent=1 // pred_region
      %s26 = sadd.s32 0, 0
      %s28 = ssub.s32 768, 768
      %29 = vsyncadd [#allocation6], %s28
      %s30 = smul.addr %s26, 6
      %s31 = smul.addr %s30, 128
      %s32 = scalar_lea.hbm %s1, %s31
      %s34 = sshll.u32 [#allocation5], 4
      %s35 = int_to_ptr.vmem [resolvable:$true] %s34
      %37 = dma.hbm_to_vmem [thread:$0]  %s32, 768, %s35, [#allocation6]
    $region9: #{tpu_custom_call.1} parent=1 // pred_fallthru
      _
    // Predicated region
    $region10: #{tpu_custom_call.1} parent=1 // pred_check
      _
    $region11: #{tpu_custom_call.1} parent=1 // pred_check_branch
      %39 = sbr.rel (0) target = $region13
    $region12: #{tpu_custom_call.1} parent=1 // pred_region
      %40 = dma.done [#allocation3], 768
    $region13: #{tpu_custom_call.1} parent=1 // pred_fallthru
      _
    // Predicated region
    $region14: #{tpu_custom_call.1} parent=1 // pred_check
      _
    $region15: #{tpu_custom_call.1} parent=1 // pred_check_branch
      %42 = sbr.rel (0) target = $region17
    $region16: #{tpu_custom_call.1} parent=1 // pred_region
      %43 = dma.done [#allocation6], 768
    $region17: #{tpu_custom_call.1} parent=1 // pred_fallthru
      _
    %s44 = sadd.s32 0, 0
    %s45 = sadd.s32 0, 0
    %p46 = scmp.eq.s32.totalorder 0, 0
    // Predicated region
    $region18: #{tpu_custom_call.1} parent=1 // pred_check
      %p47 = pneg %p46
    $region19: #{tpu_custom_call.1} parent=1 // pred_check_branch
      %49 = sbr.rel (%p47) target = $region21
    $region20: #{tpu_custom_call.1} parent=1 // pred_region
      %v50 = vlaneseq
      %vm51 = vcmp.ge.s32.totalorder %v50, 0
      %vm52 = vcmp.lt.s32.totalorder %v50, 768
      %vm53 = vmand %vm51, %vm52
      %54 = vst.msk [vmem:[#allocation7] sm:$0x3f] %vm53, 0.0
    $region21: #{tpu_custom_call.1} parent=1 // pred_fallthru
      _
    %v55 = vld [vmem:[#allocation5] sm:$0xff]
    %v56 = vld [vmem:[#allocation5 + $0x8] sm:$0xff]
    %v57 = vld [vmem:[#allocation5 + $0x10] sm:$0xff]
    %v58 = vld [vmem:[#allocation5 + $0x18] sm:$0xff]
    %v59 = vld [vmem:[#allocation5 + $0x20] sm:$0xff]
    %v60 = vld [vmem:[#allocation5 + $0x28] sm:$0xff]
    %v61 = vld [vmem:[#allocation2] sm:$0xff]
    %v62 = vld [vmem:[#allocation2 + $0x8] sm:$0xff]
    %v63 = vld [vmem:[#allocation2 + $0x10] sm:$0xff]
    %v64 = vld [vmem:[#allocation2 + $0x18] sm:$0xff]
    %v65 = vld [vmem:[#allocation2 + $0x20] sm:$0xff]
    %v66 = vld [vmem:[#allocation2 + $0x28] sm:$0xff]
    %v67 = vsub.f32 %v55, %v61
    %v68 = vsub.f32 %v56, %v62
    %v69 = vsub.f32 %v57, %v63
    %v70 = vsub.f32 %v58, %v64
    %v71 = vsub.f32 %v59, %v65
    %v72 = vsub.f32 %v60, %v66
    %v73 = vmul.f32 %v67, %v67
    %v74 = vmul.f32 %v68, %v68
    %v75 = vmul.f32 %v69, %v69
    %v76 = vmul.f32 %v70, %v70
    %v77 = vmul.f32 %v71, %v71
    %v78 = vmul.f32 %v72, %v72
    %v79 = vld [vmem:[#allocation7] sm:$0x3f]
    %v80 = vrot.slane %v73, 4
    %v81 = vadd.f32 %v73, %v80
    %v82 = vrot.slane %v81, 2
    %v83 = vadd.f32 %v81, %v82
    %v84 = vrot.slane %v83, 1
    %v85 = vadd.f32 %v83, %v84
    %v86 = vrot.slane %v74, 4
    %v87 = vadd.f32 %v74, %v86
    %v88 = vrot.slane %v87, 2
    %v89 = vadd.f32 %v87, %v88
    %v90 = vrot.slane %v89, 1
    %v91 = vadd.f32 %v89, %v90
    %v92 = vrot.slane %v75, 4
    %v93 = vadd.f32 %v75, %v92
    %v94 = vrot.slane %v93, 2
    %v95 = vadd.f32 %v93, %v94
    %v96 = vrot.slane %v95, 1
    %v97 = vadd.f32 %v95, %v96
    %v98 = vrot.slane %v76, 4
    %v99 = vadd.f32 %v76, %v98
    %v100 = vrot.slane %v99, 2
    %v101 = vadd.f32 %v99, %v100
    %v102 = vrot.slane %v101, 1
    %v103 = vadd.f32 %v101, %v102
    %v104 = vrot.slane %v77, 4
    %v105 = vadd.f32 %v77, %v104
    %v106 = vrot.slane %v105, 2
    %v107 = vadd.f32 %v105, %v106
    %v108 = vrot.slane %v107, 1
    %v109 = vadd.f32 %v107, %v108
    %v110 = vrot.slane %v78, 4
    %v111 = vadd.f32 %v78, %v110
    %v112 = vrot.slane %v111, 2
    %v113 = vadd.f32 %v111, %v112
    %v114 = vrot.slane %v113, 1
    %v115 = vadd.f32 %v113, %v114
    %v122 = vcombine.low %v85, %v91
    %v123 = vcombine.low %v97, %v103
    %v124 = vcombine.low %v109, %v115
    %v126 = vunpack.c.l.s4 1966171168
    %v127 = vunpack.c.0.s8 %v126
    %v128 = vlaneseq
    %v129 = vshrl.u32 %v128, 7
    %v130 = vsub.s32 %v127, %v129
    %v131 = vrot.slane %v122, %v130
    %v133 = vunpack.c.l.s4 1966171168
    %v134 = vunpack.c.0.s8 %v133
    %v135 = vlaneseq
    %v136 = vshrl.u32 %v135, 7
    %v137 = vsub.s32 %v134, %v136
    %v138 = vrot.slane %v123, %v137
    %v140 = vunpack.c.l.s4 1966171168
    %v141 = vunpack.c.0.s8 %v140
    %v142 = vlaneseq
    %v143 = vshrl.u32 %v142, 7
    %v144 = vsub.s32 %v141, %v143
    %v145 = vrot.slane %v124, %v144
    %v146 = vcombine.low %v131, %v138
    %v148 = vunpack.c.l.s4 1966171168
    %v149 = vunpack.c.0.s8 %v148
    %v150 = vlaneseq
    %v151 = vshrl.u32 %v150, 7
    %v152 = vsub.s32 %v149, %v151
    %v153 = vrot.slane %v146, %v152
    %v155 = vunpack.c.l.s4 1966171168
    %v156 = vunpack.c.0.s8 %v155
    %v157 = vlaneseq
    %v158 = vshrl.u32 %v157, 7
    %v159 = vsub.s32 %v156, %v158
    %v160 = vrot.slane %v145, %v159
    %v161 = vcombine.low %v153, %v160
    %v163 = vadd.f32 %v79, %v161
    %v164 = vlaneseq
    %vm165 = vcmp.ge.s32.totalorder %v164, 0
    %vm166 = vcmp.lt.s32.totalorder %v164, 768
    %vm167 = vmand %vm165, %vm166
    %168 = vst.msk [vmem:[#allocation7] sm:$0x3f] %vm167, %v163
    // Predicated region
    $region22: #{tpu_custom_call.1} parent=1 // pred_check
      _
    $region23: #{tpu_custom_call.1} parent=1 // pred_check_branch
      %170 = sbr.rel (0) target = $region25
    $region24: #{tpu_custom_call.1} parent=1 // pred_region
      %s172 = ssub.s32 96, 96
      %173 = vsyncadd [#allocation4], %s172
      %s175 = sshll.u32 [#allocation7], 4
      %s176 = int_to_ptr.vmem [resolvable:$true] %s175
      %178 = dma.vmem_to_hbm [thread:$0]  %s176, 96, %s2, [#allocation4]
    $region25: #{tpu_custom_call.1} parent=1 // pred_fallthru
      _
    // Predicated region
    $region26: #{tpu_custom_call.1} parent=1 // pred_check
      _
    $region27: #{tpu_custom_call.1} parent=1 // pred_check_branch
      %180 = sbr.rel (0) target = $region29
    $region28: #{tpu_custom_call.1} parent=1 // pred_region
      %181 = dma.done [#allocation4], 96
    $region29: #{tpu_custom_call.1} parent=1 // pred_fallthru
      _
    %182 = vsyncpa [#allocation3], 1
    %183 = vsyncpa [#allocation6], 1
    %184 = vsyncpa [#allocation4], 1

</llo_original>
